<compile_context>
chip_gen: v6e
topology: v6e:2x2x1
jax: 0.10.0
libtpu: 0.0.40
codegen_flags: <defaults>
</compile_context>

<pallas_src>
import functools

import jax
import jax.numpy as jnp
from jax.experimental import pallas as pl
from jax.experimental.pallas import tpu as pltpu


# ----------------------------------------------------------------------------- kernel
def _dtf_kernel(fd_ref, fp_ref,
                wa1_ref, ba1_ref, wb1_ref, bb1_ref,
                wa2_ref, ba2_ref, wb2_ref, bb2_ref,
                out_ref, *, approx_sigmoid):
    mm_dtype = wa1_ref.dtype
    fd = fd_ref[...]
    fp = fp_ref[...]
    # Gating lerp stays in f32:  fd*w + fp*(1-w) == fp + (fd - fp)*w
    fp32 = fp.astype(jnp.float32)
    diff = fd.astype(jnp.float32) - fp32

    def sigmoid(a):
        e = jnp.exp(-a)                                   # EUP
        if approx_sigmoid:
            return pl.reciprocal(1.0 + e, approx=True)    # EUP vrcp: keeps VPU slot free
        return 1.0 / (1.0 + e)

    def att(x_mm, wa_ref, ba_ref, wb_ref, bb_ref):
        # Linear -> (folded BN) -> ReLU -> Linear -> (folded BN) -> Sigmoid
        h = jnp.dot(x_mm, wa_ref[...],
                    preferred_element_type=jnp.float32) + ba_ref[...]
        h = jnp.maximum(h, 0.0)
        a = jnp.dot(h.astype(mm_dtype), wb_ref[...],
                    preferred_element_type=jnp.float32) + bb_ref[...]
        return sigmoid(a)

    # Branch 1: the matmul input (fd + fp) is built directly in the matmul dtype
    # (no bf16 -> f32 -> bf16 round trip when activations are bf16).
    w1 = att((fd + fp).astype(mm_dtype), wa1_ref, ba1_ref, wb1_ref, bb1_ref)
    fout1 = fp32 + diff * w1
    w2 = att(fout1.astype(mm_dtype), wa2_ref, ba2_ref, wb2_ref, bb2_ref)
    out_ref[...] = (fp32 + diff * w2).astype(out_ref.dtype)


# --------------------------------------------------------------------- param plumbing
def _fold_bn_into_linear(w, b, gamma, beta, mean, var, eps=1e-5):
    """Fold eval-mode BatchNorm1d into the preceding Linear.

    Linear: y = x @ w.T + b   (w: (out, in), b: (out,))
    BN:     z = (y - mean) * gamma / sqrt(var + eps) + beta
    Returns W_eff (in, out) and b_eff (1, out) so z = x @ W_eff + b_eff.
    """
    s = gamma / jnp.sqrt(var + eps)
    w_eff = (w * s[:, None]).T
    b_eff = (b - mean) * s + beta
    return w_eff.astype(jnp.float32), b_eff[None, :].astype(jnp.float32)


def prepare_params(params, *, weight_dtype=None, lane_pad=128):
    """Zero-pad the bottleneck (inter) dim to a lane-dense multiple of `lane_pad`
    and optionally cast the four matmul weights (biases stay f32).

    Padding is numerically exact: padded wa columns / ba entries are zero, stay zero
    through the ReLU, and the matching zero rows of wb contribute nothing.
    """
    out = dict(params)
    inter = params["wa1"].shape[1]
    pad_to = ((inter + lane_pad - 1) // lane_pad) * lane_pad if lane_pad else inter
    pad = pad_to - inter
    for br in ("1", "2"):
        wa, ba, wb = out["wa" + br], out["ba" + br], out["wb" + br]
        if pad:
            wa = jnp.pad(wa, ((0, 0), (0, pad)))
            ba = jnp.pad(ba, ((0, 0), (0, pad)))
            wb = jnp.pad(wb, ((0, pad), (0, 0)))
        if weight_dtype is not None:
            wa = wa.astype(weight_dtype)
            wb = wb.astype(weight_dtype)
        out["wa" + br], out["ba" + br], out["wb" + br] = wa, ba, wb
    return out


# --------------------------------------------------------------------------- wrapper
def _choose_tile(B, tile_b, itemsize):
    """Pick the batch tile: sublane-aligned (8 rows f32 / 16 rows sub-32-bit),
    >= 4 grid steps when the batch allows it, capped by tile_b."""
    align = 8 if itemsize >= 4 else 16
    if B <= align:
        return B                       # single block == full batch dim (always legal)
    tb = min(tile_b, pl.cdiv(B, 4))    # aim for >= 4 steps (pipeline + v7x megacore)
    tb = ((tb + align - 1) // align) * align
    return max(align, tb)


def dtf_forward(fd, fp, params, *, tile_b=2048, activation_dtype=None,
                approx_sigmoid=False):
    if activation_dtype is not None:
        fd = fd.astype(activation_dtype)
        fp = fp.astype(activation_dtype)

    B, C = fd.shape
    inter = params["wa1"].shape[1]
    out_dtype = fd.dtype

    tb = _choose_tile(B, tile_b, jnp.dtype(fd.dtype).itemsize)
    grid = (pl.cdiv(B, tb),)           # ragged tail handled by Pallas block masking

    act_spec = pl.BlockSpec((tb, C), lambda i: (i, 0))

    def resident(shape):
        # Constant index_map -> fetched once, stays VMEM-resident across the grid.
        return pl.BlockSpec(shape, lambda i: (0, 0))

    in_specs = [
        act_spec,                 # fd
        act_spec,                 # fp
        resident((C, inter)),     # wa1
        resident((1, inter)),     # ba1
        resident((inter, C)),     # wb1
        resident((1, C)),         # bb1
        resident((C, inter)),     # wa2
        resident((1, inter)),     # ba2
        resident((inter, C)),     # wb2
        resident((1, C)),         # bb2
    ]

    kernel = functools.partial(_dtf_kernel, approx_sigmoid=approx_sigmoid)

    return pl.pallas_call(
        kernel,
        out_shape=jax.ShapeDtypeStruct((B, C), out_dtype),
        grid=grid,
        in_specs=in_specs,
        out_specs=act_spec,
        compiler_params=pltpu.CompilerParams(
            # Batch tiles are fully independent -> parallel (megacore on v7x).
            dimension_semantics=("parallel",)),
    )(fd, fp,
      params["wa1"], params["ba1"], params["wb1"], params["bb1"],
      params["wa2"], params["ba2"], params["wb2"], params["bb2"])


# ------------------------------------------------------------------- test scaffolding
def _make_params(key, channels=128, r=4):
    inter = channels // r
    keys = jax.random.split(key, 24)

    def branch(ks):
        w1 = jax.random.normal(ks[0], (inter, channels), jnp.float32) * 0.1
        b1 = jax.random.normal(ks[1], (inter,), jnp.float32) * 0.1
        g1 = 1.0 + 0.1 * jax.random.normal(ks[2], (inter,), jnp.float32)
        be1 = 0.1 * jax.random.normal(ks[3], (inter,), jnp.float32)
        m1 = 0.05 * jax.random.normal(ks[4], (inter,), jnp.float32)
        v1 = 1.0 + 0.1 * jax.random.uniform(ks[5], (inter,), jnp.float32)
        w2 = jax.random.normal(ks[6], (channels, inter), jnp.float32) * 0.1
        b2 = jax.random.normal(ks[7], (channels,), jnp.float32) * 0.1
        g2 = 1.0 + 0.1 * jax.random.normal(ks[8], (channels,), jnp.float32)
        be2 = 0.1 * jax.random.normal(ks[9], (channels,), jnp.float32)
        m2 = 0.05 * jax.random.normal(ks[10], (channels,), jnp.float32)
        v2 = 1.0 + 0.1 * jax.random.uniform(ks[11], (channels,), jnp.float32)
        wa, ba = _fold_bn_into_linear(w1, b1, g1, be1, m1, v1)
        wb, bb = _fold_bn_into_linear(w2, b2, g2, be2, m2, v2)
        return wa, ba, wb, bb

    wa1, ba1, wb1, bb1 = branch(keys[0:12])
    wa2, ba2, wb2, bb2 = branch(keys[12:24])
    return dict(wa1=wa1, ba1=ba1, wb1=wb1, bb1=bb1,
                wa2=wa2, ba2=ba2, wb2=wb2, bb2=bb2)


def _reference(fd, fp, p):
    def att(x, wa, ba, wb, bb):
        h = jnp.maximum(x @ wa + ba, 0.0)
        return jax.nn.sigmoid(h @ wb + bb)
    w1 = att(fd + fp, p["wa1"], p["ba1"], p["wb1"], p["bb1"])
    fout1 = fd * w1 + fp * (1.0 - w1)
    w2 = att(fout1, p["wa2"], p["ba2"], p["wb2"], p["bb2"])
    return fd * w2 + fp * (1.0 - w2)


if __name__ == "__main__":
    channels, r = 128, 4
    key = jax.random.PRNGKey(0)
    k_fd, k_fp, k_p = jax.random.split(key, 3)
    raw = _make_params(k_p, channels=channels, r=r)   # folded-BN f32 params, inter=32

    p_f32 = prepare_params(raw)                              # inter padded to 128, f32
    p_bf16 = prepare_params(raw, weight_dtype=jnp.bfloat16)  # inter padded, bf16 weights

    # Tolerance note: XLA's reference matmul and Mosaic's in-kernel matmul may use
    # different default f32-on-MXU precisions (bf16 passes vs full f32), so the "f32"
    # checks use a tolerance that covers that gap while still catching structural bugs.
    F32_TOL = dict(atol=2e-2, rtol=2e-2)

    # 1) f32, small single-tile batch.
    batch = 8
    fd = jax.random.normal(k_fd, (batch, channels), jnp.float32)
    fp = jax.random.normal(k_fp, (batch, channels), jnp.float32)
    out = jax.block_until_ready(dtf_forward(fd, fp, p_f32))
    ref = _reference(fd, fp, raw)
    assert out.shape == (batch, channels)
    assert jnp.allclose(out, ref, **F32_TOL), "f32 single-tile mismatch"

    # 2) f32, ragged multi-tile path (B=20, tile_b=8 -> 3 grid steps, masked tail,
    #    no wrapper-side pad/slice HBM copies).
    batch2 = 20
    fd2 = jax.random.normal(jax.random.fold_in(k_fd, 1), (batch2, channels), jnp.float32)
    fp2 = jax.random.normal(jax.random.fold_in(k_fp, 1), (batch2, channels), jnp.float32)
    out2 = jax.block_until_ready(dtf_forward(fd2, fp2, p_f32, tile_b=8))
    ref2 = _reference(fd2, fp2, raw)
    assert out2.shape == (batch2, channels)
    assert jnp.allclose(out2, ref2, **F32_TOL), "f32 ragged multi-tile mismatch"

    # 3) bf16 activation/weight I/O + EUP (approx) sigmoid: the recommended HBM-bound
    #    configuration for v5e/v6e, and the reduced-cast compute path for v7x.
    out3 = jax.block_until_ready(
        dtf_forward(fd2, fp2, p_bf16, tile_b=16,
                    activation_dtype=jnp.bfloat16, approx_sigmoid=True))
    assert out3.shape == (batch2, channels)
    assert jnp.allclose(out3.astype(jnp.float32), ref2, atol=5e-2, rtol=5e-2), \
        "bf16 mismatch"

    print("KERNEL_OK")
</pallas_src>

<mosaic_0001>
module attributes {stable_mosaic.version = 11 : i64} {
  func.func @_dtf_kernel(%arg0: i32, %arg1: memref<8x128xf32, #tpu.memory_space<vmem>>, %arg2: memref<8x128xf32, #tpu.memory_space<vmem>>, %arg3: memref<128x128xf32, #tpu.memory_space<vmem>>, %arg4: memref<1x128xf32, #tpu.memory_space<vmem>>, %arg5: memref<128x128xf32, #tpu.memory_space<vmem>>, %arg6: memref<1x128xf32, #tpu.memory_space<vmem>>, %arg7: memref<128x128xf32, #tpu.memory_space<vmem>>, %arg8: memref<1x128xf32, #tpu.memory_space<vmem>>, %arg9: memref<128x128xf32, #tpu.memory_space<vmem>>, %arg10: memref<1x128xf32, #tpu.memory_space<vmem>>, %arg11: memref<8x128xf32, #tpu.memory_space<vmem>>) attributes {dimension_semantics = [#tpu.dimension_semantics<parallel>], iteration_bounds = array<i64: 1>, scalar_prefetch = 0 : i64, scratch_operands = 0 : i64, tpu.core_type = #tpu.core_type<tc>, window_params = [{transform_indices = @transform_0, window_bounds = array<i64: 8, 128>}, {transform_indices = @transform_1, window_bounds = array<i64: 8, 128>}, {pipeline_mode = #tpu.pipeline_mode<synchronous>, transform_indices = @transform_2, window_bounds = array<i64: 128, 128>}, {pipeline_mode = #tpu.pipeline_mode<synchronous>, transform_indices = @transform_3, window_bounds = array<i64: 1, 128>}, {pipeline_mode = #tpu.pipeline_mode<synchronous>, transform_indices = @transform_4, window_bounds = array<i64: 128, 128>}, {pipeline_mode = #tpu.pipeline_mode<synchronous>, transform_indices = @transform_5, window_bounds = array<i64: 1, 128>}, {pipeline_mode = #tpu.pipeline_mode<synchronous>, transform_indices = @transform_6, window_bounds = array<i64: 128, 128>}, {pipeline_mode = #tpu.pipeline_mode<synchronous>, transform_indices = @transform_7, window_bounds = array<i64: 1, 128>}, {pipeline_mode = #tpu.pipeline_mode<synchronous>, transform_indices = @transform_8, window_bounds = array<i64: 128, 128>}, {pipeline_mode = #tpu.pipeline_mode<synchronous>, transform_indices = @transform_9, window_bounds = array<i64: 1, 128>}, {transform_indices = @transform_10, window_bounds = array<i64: 8, 128>}]} {
    %c0 = arith.constant 0 : index
    %c0_0 = arith.constant 0 : index
    %0 = vector.load %arg1[%c0, %c0_0] : memref<8x128xf32, #tpu.memory_space<vmem>>, vector<8x128xf32>
    %c0_1 = arith.constant 0 : index
    %c0_2 = arith.constant 0 : index
    %1 = vector.load %arg2[%c0_1, %c0_2] : memref<8x128xf32, #tpu.memory_space<vmem>>, vector<8x128xf32>
    %2 = arith.subf %0, %1 : vector<8x128xf32>
    %3 = arith.addf %0, %1 : vector<8x128xf32>
    %c0_3 = arith.constant 0 : index
    %c0_4 = arith.constant 0 : index
    %4 = vector.load %arg3[%c0_3, %c0_4] : memref<128x128xf32, #tpu.memory_space<vmem>>, vector<128x128xf32>
    %cst = arith.constant dense<0.000000e+00> : vector<8x128xf32>
    %5 = tpu.matmul %3, %4, %cst {dimension_numbers = #tpu.dot_dimension_numbers<[1], [0], [0], [1], [0, 0, 1, 1], [], []>} : vector<8x128xf32>, vector<128x128xf32>, vector<8x128xf32> -> vector<8x128xf32>
    %c0_5 = arith.constant 0 : index
    %c0_6 = arith.constant 0 : index
    %6 = vector.load %arg4[%c0_5, %c0_6] : memref<1x128xf32, #tpu.memory_space<vmem>>, vector<1x128xf32>
    %7 = vector.broadcast %6 : vector<1x128xf32> to vector<8x128xf32>
    %8 = arith.addf %5, %7 : vector<8x128xf32>
    %cst_7 = arith.constant 0.000000e+00 : f32
    %9 = vector.broadcast %cst_7 : f32 to vector<8x128xf32>
    %10 = arith.maximumf %8, %9 : vector<8x128xf32>
    %c0_8 = arith.constant 0 : index
    %c0_9 = arith.constant 0 : index
    %11 = vector.load %arg5[%c0_8, %c0_9] : memref<128x128xf32, #tpu.memory_space<vmem>>, vector<128x128xf32>
    %cst_10 = arith.constant dense<0.000000e+00> : vector<8x128xf32>
    %12 = tpu.matmul %10, %11, %cst_10 {dimension_numbers = #tpu.dot_dimension_numbers<[1], [0], [0], [1], [0, 0, 1, 1], [], []>} : vector<8x128xf32>, vector<128x128xf32>, vector<8x128xf32> -> vector<8x128xf32>
    %c0_11 = arith.constant 0 : index
    %c0_12 = arith.constant 0 : index
    %13 = vector.load %arg6[%c0_11, %c0_12] : memref<1x128xf32, #tpu.memory_space<vmem>>, vector<1x128xf32>
    %14 = vector.broadcast %13 : vector<1x128xf32> to vector<8x128xf32>
    %15 = arith.addf %12, %14 : vector<8x128xf32>
    %cst_13 = arith.constant 0.000000e+00 : f32
    %16 = vector.broadcast %cst_13 : f32 to vector<8x128xf32>
    %17 = arith.subf %16, %15 : vector<8x128xf32>
    %18 = math.exp %17 : vector<8x128xf32>
    %cst_14 = arith.constant 1.000000e+00 : f32
    %19 = vector.broadcast %cst_14 : f32 to vector<8x128xf32>
    %20 = arith.addf %19, %18 : vector<8x128xf32>
    %cst_15 = arith.constant 1.000000e+00 : f32
    %21 = vector.broadcast %cst_15 : f32 to vector<8x128xf32>
    %22 = arith.divf %21, %20 : vector<8x128xf32>
    %23 = arith.mulf %2, %22 : vector<8x128xf32>
    %24 = arith.addf %1, %23 : vector<8x128xf32>
    %c0_16 = arith.constant 0 : index
    %c0_17 = arith.constant 0 : index
    %25 = vector.load %arg7[%c0_16, %c0_17] : memref<128x128xf32, #tpu.memory_space<vmem>>, vector<128x128xf32>
    %cst_18 = arith.constant dense<0.000000e+00> : vector<8x128xf32>
    %26 = tpu.matmul %24, %25, %cst_18 {dimension_numbers = #tpu.dot_dimension_numbers<[1], [0], [0], [1], [0, 0, 1, 1], [], []>} : vector<8x128xf32>, vector<128x128xf32>, vector<8x128xf32> -> vector<8x128xf32>
    %c0_19 = arith.constant 0 : index
    %c0_20 = arith.constant 0 : index
    %27 = vector.load %arg8[%c0_19, %c0_20] : memref<1x128xf32, #tpu.memory_space<vmem>>, vector<1x128xf32>
    %28 = vector.broadcast %27 : vector<1x128xf32> to vector<8x128xf32>
    %29 = arith.addf %26, %28 : vector<8x128xf32>
    %cst_21 = arith.constant 0.000000e+00 : f32
    %30 = vector.broadcast %cst_21 : f32 to vector<8x128xf32>
    %31 = arith.maximumf %29, %30 : vector<8x128xf32>
    %c0_22 = arith.constant 0 : index
    %c0_23 = arith.constant 0 : index
    %32 = vector.load %arg9[%c0_22, %c0_23] : memref<128x128xf32, #tpu.memory_space<vmem>>, vector<128x128xf32>
    %cst_24 = arith.constant dense<0.000000e+00> : vector<8x128xf32>
    %33 = tpu.matmul %31, %32, %cst_24 {dimension_numbers = #tpu.dot_dimension_numbers<[1], [0], [0], [1], [0, 0, 1, 1], [], []>} : vector<8x128xf32>, vector<128x128xf32>, vector<8x128xf32> -> vector<8x128xf32>
    %c0_25 = arith.constant 0 : index
    %c0_26 = arith.constant 0 : index
    %34 = vector.load %arg10[%c0_25, %c0_26] : memref<1x128xf32, #tpu.memory_space<vmem>>, vector<1x128xf32>
    %35 = vector.broadcast %34 : vector<1x128xf32> to vector<8x128xf32>
    %36 = arith.addf %33, %35 : vector<8x128xf32>
    %cst_27 = arith.constant 0.000000e+00 : f32
    %37 = vector.broadcast %cst_27 : f32 to vector<8x128xf32>
    %38 = arith.subf %37, %36 : vector<8x128xf32>
    %39 = math.exp %38 : vector<8x128xf32>
    %cst_28 = arith.constant 1.000000e+00 : f32
    %40 = vector.broadcast %cst_28 : f32 to vector<8x128xf32>
    %41 = arith.addf %40, %39 : vector<8x128xf32>
    %cst_29 = arith.constant 1.000000e+00 : f32
    %42 = vector.broadcast %cst_29 : f32 to vector<8x128xf32>
    %43 = arith.divf %42, %41 : vector<8x128xf32>
    %44 = arith.mulf %2, %43 : vector<8x128xf32>
    %45 = arith.addf %1, %44 : vector<8x128xf32>
    %c0_30 = arith.constant 0 : index
    %c0_31 = arith.constant 0 : index
    %46 = vector.load %arg11[%c0_30, %c0_31] : memref<8x128xf32, #tpu.memory_space<vmem>>, vector<8x128xf32>
    tpu.vector_store %arg11[%c0_30, %c0_31], %45 {strides = array<i32>} : memref<8x128xf32, #tpu.memory_space<vmem>>, vector<8x128xf32>,
    return
  }
  func.func @transform_0(%arg0: i32) -> (i32, i32) {
    %c0_i32 = arith.constant 0 : i32
    %c0_i32_0 = arith.constant 0 : i32
    return %arg0, %c0_i32 : i32, i32
  }
  func.func @transform_1(%arg0: i32) -> (i32, i32) {
    %c0_i32 = arith.constant 0 : i32
    %c0_i32_0 = arith.constant 0 : i32
    return %arg0, %c0_i32 : i32, i32
  }
  func.func @transform_2(%arg0: i32) -> (i32, i32) {
    %c0_i32 = arith.constant 0 : i32
    %c0_i32_0 = arith.constant 0 : i32
    %c0_i32_1 = arith.constant 0 : i32
    return %c0_i32, %c0_i32_0 : i32, i32
  }
  func.func @transform_3(%arg0: i32) -> (i32, i32) {
    %c0_i32 = arith.constant 0 : i32
    %c0_i32_0 = arith.constant 0 : i32
    %c0_i32_1 = arith.constant 0 : i32
    return %c0_i32, %c0_i32_0 : i32, i32
  }
  func.func @transform_4(%arg0: i32) -> (i32, i32) {
    %c0_i32 = arith.constant 0 : i32
    %c0_i32_0 = arith.constant 0 : i32
    %c0_i32_1 = arith.constant 0 : i32
    return %c0_i32, %c0_i32_0 : i32, i32
  }
  func.func @transform_5(%arg0: i32) -> (i32, i32) {
    %c0_i32 = arith.constant 0 : i32
    %c0_i32_0 = arith.constant 0 : i32
    %c0_i32_1 = arith.constant 0 : i32
    return %c0_i32, %c0_i32_0 : i32, i32
  }
  func.func @transform_6(%arg0: i32) -> (i32, i32) {
    %c0_i32 = arith.constant 0 : i32
    %c0_i32_0 = arith.constant 0 : i32
    %c0_i32_1 = arith.constant 0 : i32
    return %c0_i32, %c0_i32_0 : i32, i32
  }
  func.func @transform_7(%arg0: i32) -> (i32, i32) {
    %c0_i32 = arith.constant 0 : i32
    %c0_i32_0 = arith.constant 0 : i32
    %c0_i32_1 = arith.constant 0 : i32
    return %c0_i32, %c0_i32_0 : i32, i32
  }
  func.func @transform_8(%arg0: i32) -> (i32, i32) {
    %c0_i32 = arith.constant 0 : i32
    %c0_i32_0 = arith.constant 0 : i32
    %c0_i32_1 = arith.constant 0 : i32
    return %c0_i32, %c0_i32_0 : i32, i32
  }
  func.func @transform_9(%arg0: i32) -> (i32, i32) {
    %c0_i32 = arith.constant 0 : i32
    %c0_i32_0 = arith.constant 0 : i32
    %c0_i32_1 = arith.constant 0 : i32
    return %c0_i32, %c0_i32_0 : i32, i32
  }
  func.func @transform_10(%arg0: i32) -> (i32, i32) {
    %c0_i32 = arith.constant 0 : i32
    %c0_i32_0 = arith.constant 0 : i32
    return %arg0, %c0_i32 : i32, i32
  }
}

</mosaic_0001>

<llo_original>
// kernel: tpu_custom_call.1
$region0: #{tpu_custom_call.1}
  #allocation0 [shape = 'u32[]', space=smem, size = 0x4, offset = 0x4, fixed_abs, tag = 'smem constant byte address 0x4 - core index']
  #allocation1 [shape = 'u32[144,128]{1,0:T(1,128)}', space=vmem, size = 0x12000, scoped, tag = 'internal scratch']
  %s0 = inlined_call_operand.hbm [shape: f32[8,128], index: 0, kind: input, shape index: {}]
  %s1 = inlined_call_operand.hbm [shape: f32[8,128], index: 1, kind: input, shape index: {}]
  %s2 = inlined_call_operand.hbm [shape: f32[128,128], index: 2, kind: input, shape index: {}]
  %s3 = inlined_call_operand.vmem [shape: f32[1,128], index: 3, kind: input, shape index: {}]
  %s4 = inlined_call_operand.hbm [shape: f32[128,128], index: 4, kind: input, shape index: {}]
  %s5 = inlined_call_operand.vmem [shape: f32[1,128], index: 5, kind: input, shape index: {}]
  %s6 = inlined_call_operand.hbm [shape: f32[128,128], index: 6, kind: input, shape index: {}]
  %s7 = inlined_call_operand.vmem [shape: f32[1,128], index: 7, kind: input, shape index: {}]
  %s8 = inlined_call_operand.hbm [shape: f32[128,128], index: 8, kind: input, shape index: {}]
  %s9 = inlined_call_operand.vmem [shape: f32[1,128], index: 9, kind: input, shape index: {}]
  %s10 = inlined_call_operand.hbm [shape: f32[8,128], index: 10, kind: output, shape index: {}]
  %s11 = sld [smem:[#allocation0]]
  $region74: #{tpu_custom_call.1} parent=0
    _
  %s13 = ssub.s32 1, %s11
  %s14 = scalar_select 0, %s13, %s11
  $region1: #{tpu_custom_call.1} parent=0
    #allocation2 [shape = 'u8[4096]{0}', space=vmem, size = 0x1000, scoped, tag = 'input window, operand 0, single buffered']
    #allocation3 [shape = 's32[1]{0}', space=sflag, size = 0x4, scoped, tag = 'scoped memory for tpu_custom_call.1']
    #allocation4 [shape = 's32[1]{0}', space=sflag, size = 0x4, scoped, tag = 'scoped memory for tpu_custom_call.1']
    #allocation5 [shape = 'u8[4096]{0}', space=vmem, size = 0x1000, scoped, tag = 'input window, operand 1, single buffered']
    #allocation6 [shape = 's32[1]{0}', space=sflag, size = 0x4, scoped, tag = 'scoped memory for tpu_custom_call.1']
    #allocation7 [shape = 'u8[65536]{0}', space=vmem, size = 0x10000, scoped, tag = 'input window, operand 2, single buffered']
    #allocation8 [shape = 'u8[65536]{0}', space=vmem, size = 0x10000, scoped, tag = 'input window, operand 4, single buffered']
    #allocation9 [shape = 's32[1]{0}', space=sflag, size = 0x4, scoped, tag = 'scoped memory for tpu_custom_call.1']
    #allocation10 [shape = 'u8[65536]{0}', space=vmem, size = 0x10000, scoped, tag = 'input window, operand 6, single buffered']
    #allocation11 [shape = 'u8[65536]{0}', space=vmem, size = 0x10000, scoped, tag = 'input window, operand 8, single buffered']
    #allocation12 [shape = 's32[1]{0}', space=sflag, size = 0x4, scoped, tag = 'scoped memory for tpu_custom_call.1']
    #allocation13 [shape = 'u8[4096]{0}', space=vmem, size = 0x1000, scoped, tag = 'output window, operand 0, single buffered']
    %15 = vsyncpa [#allocation3], 0
    %16 = vsyncpa [#allocation6], 0
    %17 = vsyncpa [#allocation9], 0
    %18 = vsyncpa [#allocation12], 0
    %19 = vsyncpa [#allocation4], 0
    // Predicated region
    $region2: #{tpu_custom_call.1} parent=1 // pred_check
      _
    $region3: #{tpu_custom_call.1} parent=1 // pred_check_branch
      %21 = sbr.rel (0) target = $region5
    $region4: #{tpu_custom_call.1} parent=1 // pred_region
      %s23 = ssub.s32 128, 128
      %24 = vsyncadd [#allocation3], %s23
      %s26 = sshll.u32 [#allocation2], 4
      %s27 = int_to_ptr.vmem [resolvable:$true] %s26
      %29 = dma.hbm_to_vmem [thread:$0]  %s0, 128, %s27, [#allocation3]
    $region5: #{tpu_custom_call.1} parent=1 // pred_fallthru
      _
    // Predicated region
    $region6: #{tpu_custom_call.1} parent=1 // pred_check
      _
    $region7: #{tpu_custom_call.1} parent=1 // pred_check_branch
      %31 = sbr.rel (0) target = $region9
    $region8: #{tpu_custom_call.1} parent=1 // pred_region
      %s33 = ssub.s32 128, 128
      %34 = vsyncadd [#allocation6], %s33
      %s36 = sshll.u32 [#allocation5], 4
      %s37 = int_to_ptr.vmem [resolvable:$true] %s36
      %39 = dma.hbm_to_vmem [thread:$0]  %s1, 128, %s37, [#allocation6]
    $region9: #{tpu_custom_call.1} parent=1 // pred_fallthru
      _
    // Predicated region
    $region10: #{tpu_custom_call.1} parent=1 // pred_check
      _
    $region11: #{tpu_custom_call.1} parent=1 // pred_check_branch
      %41 = sbr.rel (0) target = $region13
    $region12: #{tpu_custom_call.1} parent=1 // pred_region
      %s43 = ssub.s32 2048, 2048
      %44 = vsyncadd [#allocation6], %s43
      %s45 = sshll.u32 [#allocation7], 4
      %s46 = int_to_ptr.vmem [resolvable:$true] %s45
      %51 = dma.hbm_to_vmem [thread:$0]  %s2, 2048, %s46, [#allocation6], 128, 128, 8
    $region13: #{tpu_custom_call.1} parent=1 // pred_fallthru
      _
    // Predicated region
    $region14: #{tpu_custom_call.1} parent=1 // pred_check
      _
    $region15: #{tpu_custom_call.1} parent=1 // pred_check_branch
      %53 = sbr.rel (0) target = $region17
    $region16: #{tpu_custom_call.1} parent=1 // pred_region
      _
    $region17: #{tpu_custom_call.1} parent=1 // pred_fallthru
      _
    // Predicated region
    $region18: #{tpu_custom_call.1} parent=1 // pred_check
      _
    $region19: #{tpu_custom_call.1} parent=1 // pred_check_branch
      %55 = sbr.rel (0) target = $region21
    $region20: #{tpu_custom_call.1} parent=1 // pred_region
      %s57 = ssub.s32 2048, 2048
      %58 = vsyncadd [#allocation9], %s57
      %s59 = sshll.u32 [#allocation8], 4
      %s60 = int_to_ptr.vmem [resolvable:$true] %s59
      %65 = dma.hbm_to_vmem [thread:$0]  %s4, 2048, %s60, [#allocation9], 128, 128, 8
    $region21: #{tpu_custom_call.1} parent=1 // pred_fallthru
      _
    // Predicated region
    $region22: #{tpu_custom_call.1} parent=1 // pred_check
      _
    $region23: #{tpu_custom_call.1} parent=1 // pred_check_branch
      %67 = sbr.rel (0) target = $region25
    $region24: #{tpu_custom_call.1} parent=1 // pred_region
      _
    $region25: #{tpu_custom_call.1} parent=1 // pred_fallthru
      _
    // Predicated region
    $region26: #{tpu_custom_call.1} parent=1 // pred_check
      _
    $region27: #{tpu_custom_call.1} parent=1 // pred_check_branch
      %69 = sbr.rel (0) target = $region29
    $region28: #{tpu_custom_call.1} parent=1 // pred_region
      %s71 = ssub.s32 2048, 2048
      %72 = vsyncadd [#allocation9], %s71
      %s73 = sshll.u32 [#allocation10], 4
      %s74 = int_to_ptr.vmem [resolvable:$true] %s73
      %79 = dma.hbm_to_vmem [thread:$0]  %s6, 2048, %s74, [#allocation9], 128, 128, 8
    $region29: #{tpu_custom_call.1} parent=1 // pred_fallthru
      _
    // Predicated region
    $region30: #{tpu_custom_call.1} parent=1 // pred_check
      _
    $region31: #{tpu_custom_call.1} parent=1 // pred_check_branch
      %81 = sbr.rel (0) target = $region33
    $region32: #{tpu_custom_call.1} parent=1 // pred_region
      _
    $region33: #{tpu_custom_call.1} parent=1 // pred_fallthru
      _
    // Predicated region
    $region34: #{tpu_custom_call.1} parent=1 // pred_check
      _
    $region35: #{tpu_custom_call.1} parent=1 // pred_check_branch
      %83 = sbr.rel (0) target = $region37
    $region36: #{tpu_custom_call.1} parent=1 // pred_region
      %s85 = ssub.s32 2048, 2048
      %86 = vsyncadd [#allocation12], %s85
      %s87 = sshll.u32 [#allocation11], 4
      %s88 = int_to_ptr.vmem [resolvable:$true] %s87
      %93 = dma.hbm_to_vmem [thread:$0]  %s8, 2048, %s88, [#allocation12], 128, 128, 8
    $region37: #{tpu_custom_call.1} parent=1 // pred_fallthru
      _
    // Predicated region
    $region38: #{tpu_custom_call.1} parent=1 // pred_check
      _
    $region39: #{tpu_custom_call.1} parent=1 // pred_check_branch
      %95 = sbr.rel (0) target = $region41
    $region40: #{tpu_custom_call.1} parent=1 // pred_region
      _
    $region41: #{tpu_custom_call.1} parent=1 // pred_fallthru
      _
    // Predicated region
    $region42: #{tpu_custom_call.1} parent=1 // pred_check
      _
    $region43: #{tpu_custom_call.1} parent=1 // pred_check_branch
      %97 = sbr.rel (0) target = $region45
    $region44: #{tpu_custom_call.1} parent=1 // pred_region
      %98 = dma.done [#allocation3], 128
    $region45: #{tpu_custom_call.1} parent=1 // pred_fallthru
      _
    // Predicated region
    $region46: #{tpu_custom_call.1} parent=1 // pred_check
      _
    $region47: #{tpu_custom_call.1} parent=1 // pred_check_branch
      %100 = sbr.rel (0) target = $region49
    $region48: #{tpu_custom_call.1} parent=1 // pred_region
      %101 = dma.done [#allocation6], 128
    $region49: #{tpu_custom_call.1} parent=1 // pred_fallthru
      _
    // Predicated region
    $region50: #{tpu_custom_call.1} parent=1 // pred_check
      _
    $region51: #{tpu_custom_call.1} parent=1 // pred_check_branch
      %103 = sbr.rel (0) target = $region53
    $region52: #{tpu_custom_call.1} parent=1 // pred_region
      %104 = dma.done [#allocation6], 2048
    $region53: #{tpu_custom_call.1} parent=1 // pred_fallthru
      _
    // Predicated region
    $region54: #{tpu_custom_call.1} parent=1 // pred_check
      _
    $region55: #{tpu_custom_call.1} parent=1 // pred_check_branch
      %106 = sbr.rel (0) target = $region57
    $region56: #{tpu_custom_call.1} parent=1 // pred_region
      %107 = dma.done [#allocation9], 2048
    $region57: #{tpu_custom_call.1} parent=1 // pred_fallthru
      _
    // Predicated region
    $region58: #{tpu_custom_call.1} parent=1 // pred_check
      _
    $region59: #{tpu_custom_call.1} parent=1 // pred_check_branch
      %109 = sbr.rel (0) target = $region61
    $region60: #{tpu_custom_call.1} parent=1 // pred_region
      %110 = dma.done [#allocation9], 2048
    $region61: #{tpu_custom_call.1} parent=1 // pred_fallthru
      _
    // Predicated region
    $region62: #{tpu_custom_call.1} parent=1 // pred_check
      _
    $region63: #{tpu_custom_call.1} parent=1 // pred_check_branch
      %112 = sbr.rel (0) target = $region65
    $region64: #{tpu_custom_call.1} parent=1 // pred_region
      %113 = dma.done [#allocation12], 2048
    $region65: #{tpu_custom_call.1} parent=1 // pred_fallthru
      _
    %v114 = vld [vmem:[#allocation2] sm:$0xff]
    %v115 = vld [vmem:[#allocation5] sm:$0xff]
    %v116 = vsub.f32 %v114, %v115
    %v117 = vadd.f32 %v114, %v115
    %v118 = vld [vmem:[#allocation7] sm:$0xff]
    %v119 = vld [vmem:[#allocation7 + $0x8] sm:$0xff]
    %v120 = vld [vmem:[#allocation7 + $0x10] sm:$0xff]
    %v121 = vld [vmem:[#allocation7 + $0x18] sm:$0xff]
    %v122 = vld [vmem:[#allocation7 + $0x20] sm:$0xff]
    %v123 = vld [vmem:[#allocation7 + $0x28] sm:$0xff]
    %v124 = vld [vmem:[#allocation7 + $0x30] sm:$0xff]
    %v125 = vld [vmem:[#allocation7 + $0x38] sm:$0xff]
    %v126 = vld [vmem:[#allocation7 + $0x40] sm:$0xff]
    %v127 = vld [vmem:[#allocation7 + $0x48] sm:$0xff]
    %v128 = vld [vmem:[#allocation7 + $0x50] sm:$0xff]
    %v129 = vld [vmem:[#allocation7 + $0x58] sm:$0xff]
    %v130 = vld [vmem:[#allocation7 + $0x60] sm:$0xff]
    %v131 = vld [vmem:[#allocation7 + $0x68] sm:$0xff]
    %v132 = vld [vmem:[#allocation7 + $0x70] sm:$0xff]
    %v133 = vld [vmem:[#allocation7 + $0x78] sm:$0xff]
    %v134 = vld [vmem:[%s3] sm:$0x1]
    %v136 = vlaneseq
    %v137 = vshrl.u32 %v136, 7
    %v138 = vsub.s32 0, %v137
    %v139 = vrot.slane %v134, %v138
    %141 = vmatprep.subr.mxu0 0.0
    %142 = vmatpush1.msra.mxu0 %v133
    %143 = vmatprep.subr.mxu0 0.0
    %144 = vmatpush1.msra.mxu0 %v132
    %145 = vmatprep.subr.mxu0 0.0
    %146 = vmatpush1.msra.mxu0 %v131
    %147 = vmatprep.subr.mxu0 0.0
    %148 = vmatpush1.msra.mxu0 %v130
    %149 = vmatprep.subr.mxu0 0.0
    %150 = vmatpush1.msra.mxu0 %v129
    %151 = vmatprep.subr.mxu0 0.0
    %152 = vmatpush1.msra.mxu0 %v128
    %153 = vmatprep.subr.mxu0 0.0
    %154 = vmatpush1.msra.mxu0 %v127
    %155 = vmatprep.subr.mxu0 0.0
    %156 = vmatpush1.msra.mxu0 %v126
    %157 = vmatprep.subr.mxu0 0.0
    %158 = vmatpush1.msra.mxu0 %v125
    %159 = vmatprep.subr.mxu0 0.0
    %160 = vmatpush1.msra.mxu0 %v124
    %161 = vmatprep.subr.mxu0 0.0
    %162 = vmatpush1.msra.mxu0 %v123
    %163 = vmatprep.subr.mxu0 0.0
    %164 = vmatpush1.msra.mxu0 %v122
    %165 = vmatprep.subr.mxu0 0.0
    %166 = vmatpush1.msra.mxu0 %v121
    %167 = vmatprep.subr.mxu0 0.0
    %168 = vmatpush1.msra.mxu0 %v120
    %169 = vmatprep.subr.mxu0 0.0
    %170 = vmatpush1.msra.mxu0 %v119
    %171 = vmatprep.subr.mxu0 0.0
    %172 = vmatpush1.msra.mxu0 %v118
    %173 = vmatprep.subr.mxu0 0.0
    %174 = vmatpush2.msra.mxu0 0.0
    %175 = vmatprep.subr.mxu0 0.0
    %176 = vmatpush2.msra.mxu0 0.0
    %177 = vmatprep.subr.mxu0 0.0
    %178 = vmatpush2.msra.mxu0 0.0
    %179 = vmatprep.subr.mxu0 0.0
    %180 = vmatpush2.msra.mxu0 0.0
    %181 = vmatprep.subr.mxu0 0.0
    %182 = vmatpush2.msra.mxu0 0.0
    %183 = vmatprep.subr.mxu0 0.0
    %184 = vmatpush2.msra.mxu0 0.0
    %185 = vmatprep.subr.mxu0 0.0
    %186 = vmatpush2.msra.mxu0 0.0
    %187 = vmatprep.subr.mxu0 0.0
    %188 = vmatpush2.msra.mxu0 0.0
    %189 = vmatprep.subr.mxu0 0.0
    %190 = vmatpush2.msra.mxu0 0.0
    %191 = vmatprep.subr.mxu0 0.0
    %192 = vmatpush2.msra.mxu0 0.0
    %193 = vmatprep.subr.mxu0 0.0
    %194 = vmatpush2.msra.mxu0 0.0
    %195 = vmatprep.subr.mxu0 0.0
    %196 = vmatpush2.msra.mxu0 0.0
    %197 = vmatprep.subr.mxu0 0.0
    %198 = vmatpush2.msra.mxu0 0.0
    %199 = vmatprep.subr.mxu0 0.0
    %200 = vmatpush2.msra.mxu0 0.0
    %201 = vmatprep.subr.mxu0 0.0
    %202 = vmatpush2.msra.mxu0 0.0
    %203 = vmatprep.subr.mxu0 0.0
    %204 = vmatpush2.msra.mxu0 0.0
    %205 = vmatprep.mubr.f32.mxu0 0.0
    %206 = vmatmul.mubr.f32.gmra.mxu0 %v117
    %v207 = vpop.f32.mrf.mxu0
    %v208 = vadd.f32 %v139, %v207
    %v209 = vpop.f32.mrf.mxu0
    %210 = vdwg.mxu0
    %v211 = vmax.f32 %v208, 0.0
    %v212 = vld [vmem:[#allocation8] sm:$0xff]
    %v213 = vld [vmem:[#allocation8 + $0x8] sm:$0xff]
    %v214 = vld [vmem:[#allocation8 + $0x10] sm:$0xff]
    %v215 = vld [vmem:[#allocation8 + $0x18] sm:$0xff]
    %v216 = vld [vmem:[#allocation8 + $0x20] sm:$0xff]
    %v217 = vld [vmem:[#allocation8 + $0x28] sm:$0xff]
    %v218 = vld [vmem:[#allocation8 + $0x30] sm:$0xff]
    %v219 = vld [vmem:[#allocation8 + $0x38] sm:$0xff]
    %v220 = vld [vmem:[#allocation8 + $0x40] sm:$0xff]
    %v221 = vld [vmem:[#allocation8 + $0x48] sm:$0xff]
    %v222 = vld [vmem:[#allocation8 + $0x50] sm:$0xff]
    %v223 = vld [vmem:[#allocation8 + $0x58] sm:$0xff]
    %v224 = vld [vmem:[#allocation8 + $0x60] sm:$0xff]
    %v225 = vld [vmem:[#allocation8 + $0x68] sm:$0xff]
    %v226 = vld [vmem:[#allocation8 + $0x70] sm:$0xff]
    %v227 = vld [vmem:[#allocation8 + $0x78] sm:$0xff]
    %v228 = vld [vmem:[%s5] sm:$0x1]
    %v230 = vlaneseq
    %v231 = vshrl.u32 %v230, 7
    %v232 = vsub.s32 0, %v231
    %v233 = vrot.slane %v228, %v232
    %235 = vmatprep.subr.mxu0 0.0
    %236 = vmatpush1.msra.mxu0 %v227
    %237 = vmatprep.subr.mxu0 0.0
    %238 = vmatpush1.msra.mxu0 %v226
    %239 = vmatprep.subr.mxu0 0.0
    %240 = vmatpush1.msra.mxu0 %v225
    %241 = vmatprep.subr.mxu0 0.0
    %242 = vmatpush1.msra.mxu0 %v224
    %243 = vmatprep.subr.mxu0 0.0
    %244 = vmatpush1.msra.mxu0 %v223
    %245 = vmatprep.subr.mxu0 0.0
    %246 = vmatpush1.msra.mxu0 %v222
    %247 = vmatprep.subr.mxu0 0.0
    %248 = vmatpush1.msra.mxu0 %v221
    %249 = vmatprep.subr.mxu0 0.0
    %250 = vmatpush1.msra.mxu0 %v220
    %251 = vmatprep.subr.mxu0 0.0
    %252 = vmatpush1.msra.mxu0 %v219
    %253 = vmatprep.subr.mxu0 0.0
    %254 = vmatpush1.msra.mxu0 %v218
    %255 = vmatprep.subr.mxu0 0.0
    %256 = vmatpush1.msra.mxu0 %v217
    %257 = vmatprep.subr.mxu0 0.0
    %258 = vmatpush1.msra.mxu0 %v216
    %259 = vmatprep.subr.mxu0 0.0
    %260 = vmatpush1.msra.mxu0 %v215
    %261 = vmatprep.subr.mxu0 0.0
    %262 = vmatpush1.msra.mxu0 %v214
    %263 = vmatprep.subr.mxu0 0.0
    %264 = vmatpush1.msra.mxu0 %v213
    %265 = vmatprep.subr.mxu0 0.0
    %266 = vmatpush1.msra.mxu0 %v212
    %267 = vmatprep.subr.mxu0 0.0
    %268 = vmatpush2.msra.mxu0 0.0
    %269 = vmatprep.subr.mxu0 0.0
    %270 = vmatpush2.msra.mxu0 0.0
    %271 = vmatprep.subr.mxu0 0.0
    %272 = vmatpush2.msra.mxu0 0.0
    %273 = vmatprep.subr.mxu0 0.0
    %274 = vmatpush2.msra.mxu0 0.0
    %275 = vmatprep.subr.mxu0 0.0
    %276 = vmatpush2.msra.mxu0 0.0
    %277 = vmatprep.subr.mxu0 0.0
    %278 = vmatpush2.msra.mxu0 0.0
    %279 = vmatprep.subr.mxu0 0.0
    %280 = vmatpush2.msra.mxu0 0.0
    %281 = vmatprep.subr.mxu0 0.0
    %282 = vmatpush2.msra.mxu0 0.0
    %283 = vmatprep.subr.mxu0 0.0
    %284 = vmatpush2.msra.mxu0 0.0
    %285 = vmatprep.subr.mxu0 0.0
    %286 = vmatpush2.msra.mxu0 0.0
    %287 = vmatprep.subr.mxu0 0.0
    %288 = vmatpush2.msra.mxu0 0.0
    %289 = vmatprep.subr.mxu0 0.0
    %290 = vmatpush2.msra.mxu0 0.0
    %291 = vmatprep.subr.mxu0 0.0
    %292 = vmatpush2.msra.mxu0 0.0
    %293 = vmatprep.subr.mxu0 0.0
    %294 = vmatpush2.msra.mxu0 0.0
    %295 = vmatprep.subr.mxu0 0.0
    %296 = vmatpush2.msra.mxu0 0.0
    %297 = vmatprep.subr.mxu0 0.0
    %298 = vmatpush2.msra.mxu0 0.0
    %299 = vmatprep.mubr.f32.mxu0 0.0
    %300 = vmatmul.mubr.f32.gmra.mxu0 %v211
    %v301 = vpop.f32.mrf.mxu0
    %v302 = vadd.f32 %v233, %v301
    %v303 = vpop.f32.mrf.mxu0
    %304 = vdwg.mxu0
    %v305 = vsub.f32 0.0, %v302
    %v306 = vmul.f32 %v305, 1.442695
    %v307 = vpow.pop %v306
    %v308 = vadd.f32 %v307, 1.0
    %v309 = vrcp.pop %v308
    %v310 = vmul.f32 1.0, %v309
    %v311 = vmul.f32 %v116, %v310
    %v312 = vadd.f32 %v115, %v311
    %v313 = vld [vmem:[#allocation10] sm:$0xff]
    %v314 = vld [vmem:[#allocation10 + $0x8] sm:$0xff]
    %v315 = vld [vmem:[#allocation10 + $0x10] sm:$0xff]
    %v316 = vld [vmem:[#allocation10 + $0x18] sm:$0xff]
    %v317 = vld [vmem:[#allocation10 + $0x20] sm:$0xff]
    %v318 = vld [vmem:[#allocation10 + $0x28] sm:$0xff]
    %v319 = vld [vmem:[#allocation10 + $0x30] sm:$0xff]
    %v320 = vld [vmem:[#allocation10 + $0x38] sm:$0xff]
    %v321 = vld [vmem:[#allocation10 + $0x40] sm:$0xff]
    %v322 = vld [vmem:[#allocation10 + $0x48] sm:$0xff]
    %v323 = vld [vmem:[#allocation10 + $0x50] sm:$0xff]
    %v324 = vld [vmem:[#allocation10 + $0x58] sm:$0xff]
    %v325 = vld [vmem:[#allocation10 + $0x60] sm:$0xff]
    %v326 = vld [vmem:[#allocation10 + $0x68] sm:$0xff]
    %v327 = vld [vmem:[#allocation10 + $0x70] sm:$0xff]
    %v328 = vld [vmem:[#allocation10 + $0x78] sm:$0xff]
    %v329 = vld [vmem:[%s7] sm:$0x1]
    %v331 = vlaneseq
    %v332 = vshrl.u32 %v331, 7
    %v333 = vsub.s32 0, %v332
    %v334 = vrot.slane %v329, %v333
    %336 = vmatprep.subr.mxu0 0.0
    %337 = vmatpush1.msra.mxu0 %v328
    %338 = vmatprep.subr.mxu0 0.0
    %339 = vmatpush1.msra.mxu0 %v327
    %340 = vmatprep.subr.mxu0 0.0
    %341 = vmatpush1.msra.mxu0 %v326
    %342 = vmatprep.subr.mxu0 0.0
    %343 = vmatpush1.msra.mxu0 %v325
    %344 = vmatprep.subr.mxu0 0.0
    %345 = vmatpush1.msra.mxu0 %v324
    %346 = vmatprep.subr.mxu0 0.0
    %347 = vmatpush1.msra.mxu0 %v323
    %348 = vmatprep.subr.mxu0 0.0
    %349 = vmatpush1.msra.mxu0 %v322
    %350 = vmatprep.subr.mxu0 0.0
    %351 = vmatpush1.msra.mxu0 %v321
    %352 = vmatprep.subr.mxu0 0.0
    %353 = vmatpush1.msra.mxu0 %v320
    %354 = vmatprep.subr.mxu0 0.0
    %355 = vmatpush1.msra.mxu0 %v319
    %356 = vmatprep.subr.mxu0 0.0
    %357 = vmatpush1.msra.mxu0 %v318
    %358 = vmatprep.subr.mxu0 0.0
    %359 = vmatpush1.msra.mxu0 %v317
    %360 = vmatprep.subr.mxu0 0.0
    %361 = vmatpush1.msra.mxu0 %v316
    %362 = vmatprep.subr.mxu0 0.0
    %363 = vmatpush1.msra.mxu0 %v315
    %364 = vmatprep.subr.mxu0 0.0
    %365 = vmatpush1.msra.mxu0 %v314
    %366 = vmatprep.subr.mxu0 0.0
    %367 = vmatpush1.msra.mxu0 %v313
    %368 = vmatprep.subr.mxu0 0.0
    %369 = vmatpush2.msra.mxu0 0.0
    %370 = vmatprep.subr.mxu0 0.0
    %371 = vmatpush2.msra.mxu0 0.0
    %372 = vmatprep.subr.mxu0 0.0
    %373 = vmatpush2.msra.mxu0 0.0
    %374 = vmatprep.subr.mxu0 0.0
    %375 = vmatpush2.msra.mxu0 0.0
    %376 = vmatprep.subr.mxu0 0.0
    %377 = vmatpush2.msra.mxu0 0.0
    %378 = vmatprep.subr.mxu0 0.0
    %379 = vmatpush2.msra.mxu0 0.0
    %380 = vmatprep.subr.mxu0 0.0
    %381 = vmatpush2.msra.mxu0 0.0
    %382 = vmatprep.subr.mxu0 0.0
    %383 = vmatpush2.msra.mxu0 0.0
    %384 = vmatprep.subr.mxu0 0.0
    %385 = vmatpush2.msra.mxu0 0.0
    %386 = vmatprep.subr.mxu0 0.0
    %387 = vmatpush2.msra.mxu0 0.0
    %388 = vmatprep.subr.mxu0 0.0
    %389 = vmatpush2.msra.mxu0 0.0
    %390 = vmatprep.subr.mxu0 0.0
    %391 = vmatpush2.msra.mxu0 0.0
    %392 = vmatprep.subr.mxu0 0.0
    %393 = vmatpush2.msra.mxu0 0.0
    %394 = vmatprep.subr.mxu0 0.0
    %395 = vmatpush2.msra.mxu0 0.0
    %396 = vmatprep.subr.mxu0 0.0
    %397 = vmatpush2.msra.mxu0 0.0
    %398 = vmatprep.subr.mxu0 0.0
    %399 = vmatpush2.msra.mxu0 0.0
    %400 = vmatprep.mubr.f32.mxu0 0.0
    %401 = vmatmul.mubr.f32.gmra.mxu0 %v312
    %v402 = vpop.f32.mrf.mxu0
    %v403 = vadd.f32 %v334, %v402
    %v404 = vpop.f32.mrf.mxu0
    %405 = vdwg.mxu0
    %v406 = vmax.f32 %v403, 0.0
    %v407 = vld [vmem:[#allocation11] sm:$0xff]
    %v408 = vld [vmem:[#allocation11 + $0x8] sm:$0xff]
    %v409 = vld [vmem:[#allocation11 + $0x10] sm:$0xff]
    %v410 = vld [vmem:[#allocation11 + $0x18] sm:$0xff]
    %v411 = vld [vmem:[#allocation11 + $0x20] sm:$0xff]
    %v412 = vld [vmem:[#allocation11 + $0x28] sm:$0xff]
    %v413 = vld [vmem:[#allocation11 + $0x30] sm:$0xff]
    %v414 = vld [vmem:[#allocation11 + $0x38] sm:$0xff]
    %v415 = vld [vmem:[#allocation11 + $0x40] sm:$0xff]
    %v416 = vld [vmem:[#allocation11 + $0x48] sm:$0xff]
    %v417 = vld [vmem:[#allocation11 + $0x50] sm:$0xff]
    %v418 = vld [vmem:[#allocation11 + $0x58] sm:$0xff]
    %v419 = vld [vmem:[#allocation11 + $0x60] sm:$0xff]
    %v420 = vld [vmem:[#allocation11 + $0x68] sm:$0xff]
    %v421 = vld [vmem:[#allocation11 + $0x70] sm:$0xff]
    %v422 = vld [vmem:[#allocation11 + $0x78] sm:$0xff]
    %v423 = vld [vmem:[%s9] sm:$0x1]
    %v425 = vlaneseq
    %v426 = vshrl.u32 %v425, 7
    %v427 = vsub.s32 0, %v426
    %v428 = vrot.slane %v423, %v427
    %430 = vmatprep.subr.mxu0 0.0
    %431 = vmatpush1.msra.mxu0 %v422
    %432 = vmatprep.subr.mxu0 0.0
    %433 = vmatpush1.msra.mxu0 %v421
    %434 = vmatprep.subr.mxu0 0.0
    %435 = vmatpush1.msra.mxu0 %v420
    %436 = vmatprep.subr.mxu0 0.0
    %437 = vmatpush1.msra.mxu0 %v419
    %438 = vmatprep.subr.mxu0 0.0
    %439 = vmatpush1.msra.mxu0 %v418
    %440 = vmatprep.subr.mxu0 0.0
    %441 = vmatpush1.msra.mxu0 %v417
    %442 = vmatprep.subr.mxu0 0.0
    %443 = vmatpush1.msra.mxu0 %v416
    %444 = vmatprep.subr.mxu0 0.0
    %445 = vmatpush1.msra.mxu0 %v415
    %446 = vmatprep.subr.mxu0 0.0
    %447 = vmatpush1.msra.mxu0 %v414
    %448 = vmatprep.subr.mxu0 0.0
    %449 = vmatpush1.msra.mxu0 %v413
    %450 = vmatprep.subr.mxu0 0.0
    %451 = vmatpush1.msra.mxu0 %v412
    %452 = vmatprep.subr.mxu0 0.0
    %453 = vmatpush1.msra.mxu0 %v411
    %454 = vmatprep.subr.mxu0 0.0
    %455 = vmatpush1.msra.mxu0 %v410
    %456 = vmatprep.subr.mxu0 0.0
    %457 = vmatpush1.msra.mxu0 %v409
    %458 = vmatprep.subr.mxu0 0.0
    %459 = vmatpush1.msra.mxu0 %v408
    %460 = vmatprep.subr.mxu0 0.0
    %461 = vmatpush1.msra.mxu0 %v407
    %462 = vmatprep.subr.mxu0 0.0
    %463 = vmatpush2.msra.mxu0 0.0
    %464 = vmatprep.subr.mxu0 0.0
    %465 = vmatpush2.msra.mxu0 0.0
    %466 = vmatprep.subr.mxu0 0.0
    %467 = vmatpush2.msra.mxu0 0.0
    %468 = vmatprep.subr.mxu0 0.0
    %469 = vmatpush2.msra.mxu0 0.0
    %470 = vmatprep.subr.mxu0 0.0
    %471 = vmatpush2.msra.mxu0 0.0
    %472 = vmatprep.subr.mxu0 0.0
    %473 = vmatpush2.msra.mxu0 0.0
    %474 = vmatprep.subr.mxu0 0.0
    %475 = vmatpush2.msra.mxu0 0.0
    %476 = vmatprep.subr.mxu0 0.0
    %477 = vmatpush2.msra.mxu0 0.0
    %478 = vmatprep.subr.mxu0 0.0
    %479 = vmatpush2.msra.mxu0 0.0
    %480 = vmatprep.subr.mxu0 0.0
    %481 = vmatpush2.msra.mxu0 0.0
    %482 = vmatprep.subr.mxu0 0.0
    %483 = vmatpush2.msra.mxu0 0.0
    %484 = vmatprep.subr.mxu0 0.0
    %485 = vmatpush2.msra.mxu0 0.0
    %486 = vmatprep.subr.mxu0 0.0
    %487 = vmatpush2.msra.mxu0 0.0
    %488 = vmatprep.subr.mxu0 0.0
    %489 = vmatpush2.msra.mxu0 0.0
    %490 = vmatprep.subr.mxu0 0.0
    %491 = vmatpush2.msra.mxu0 0.0
    %492 = vmatprep.subr.mxu0 0.0
    %493 = vmatpush2.msra.mxu0 0.0
    %494 = vmatprep.mubr.f32.mxu0 0.0
    %495 = vmatmul.mubr.f32.gmra.mxu0 %v406
    %v496 = vpop.f32.mrf.mxu0
    %v497 = vadd.f32 %v428, %v496
    %v498 = vpop.f32.mrf.mxu0
    %499 = vdwg.mxu0
    %v500 = vsub.f32 0.0, %v497
    %v501 = vmul.f32 %v500, 1.442695
    %v502 = vpow.pop %v501
    %v503 = vadd.f32 %v502, 1.0
    %v504 = vrcp.pop %v503
    %v505 = vmul.f32 1.0, %v504
    %v506 = vmul.f32 %v116, %v505
    %v507 = vadd.f32 %v115, %v506
    %508 = vst [vmem:[#allocation13] sm:$0xff] %v507
    // Predicated region
    $region66: #{tpu_custom_call.1} parent=1 // pred_check
      _
    $region67: #{tpu_custom_call.1} parent=1 // pred_check_branch
      %510 = sbr.rel (0) target = $region69
    $region68: #{tpu_custom_call.1} parent=1 // pred_region
      %s512 = ssub.s32 128, 128
      %513 = vsyncadd [#allocation4], %s512
      %s515 = sshll.u32 [#allocation13], 4
      %s516 = int_to_ptr.vmem [resolvable:$true] %s515
      %518 = dma.vmem_to_hbm [thread:$0]  %s516, 128, %s10, [#allocation4]
    $region69: #{tpu_custom_call.1} parent=1 // pred_fallthru
      _
    // Predicated region
    $region70: #{tpu_custom_call.1} parent=1 // pred_check
      _
    $region71: #{tpu_custom_call.1} parent=1 // pred_check_branch
      %520 = sbr.rel (0) target = $region73
    $region72: #{tpu_custom_call.1} parent=1 // pred_region
      %521 = dma.done [#allocation4], 128
    $region73: #{tpu_custom_call.1} parent=1 // pred_fallthru
      _
    %522 = vsyncpa [#allocation3], 1
    %523 = vsyncpa [#allocation6], 1
    %524 = vsyncpa [#allocation9], 1
    %525 = vsyncpa [#allocation12], 1
    %526 = vsyncpa [#allocation4], 1

</llo_original>
